<compile_context>
chip_gen: v5e
topology: v5e:2x2
jax: 0.10.0
libtpu: 0.0.40
codegen_flags: <defaults>
</compile_context>

<pallas_src>
import jax
import jax.numpy as jnp
from jax.experimental import pallas as pl
from jax.experimental.pallas import tpu as pltpu

# Logical and lane-padded dims.
D_IN = 784            # 28*28 (block == full array, so no K padding needed)
H1, H1P = 200, 256
H2, H2P = 100, 128
OUT, OUTP = 10, 128
MAX_TB = 1024         # max batch-tile rows per grid step


def _sigmoid(h):
    # Stable sigmoid via a single EUP tanh per element.
    return 0.5 * (jnp.tanh(0.5 * h) + 1.0)


def _mlp_kernel(x_ref, w1_ref, b1_ref, w2_ref, b2_ref, w3_ref, b3_ref, o_ref):
    x = x_ref[...].astype(jnp.bfloat16)                          # in-kernel cast
    h = jnp.dot(x, w1_ref[...], preferred_element_type=jnp.float32)
    h = _sigmoid(h + b1_ref[...])                                # f32 activations
    h = jnp.dot(h.astype(jnp.bfloat16), w2_ref[...],
                preferred_element_type=jnp.float32)
    h = _sigmoid(h + b2_ref[...])
    h = jnp.dot(h.astype(jnp.bfloat16), w3_ref[...],
                preferred_element_type=jnp.float32)
    h = _sigmoid(h + b3_ref[...])
    o_ref[...] = h.astype(o_ref.dtype)                           # (TB, 128) bf16


def _pad2(a, shape):
    return jnp.pad(a, ((0, shape[0] - a.shape[0]), (0, shape[1] - a.shape[1])))


def _choose_tile(B):
    """Pick (TB, B_pad): small batches -> one small tile, large -> >=2 tiles."""
    B16 = 16 * pl.cdiv(B, 16)
    if B16 <= 32:
        tb = B16                                    # tiny (inference-style) batch
    else:
        tb = min(MAX_TB, 16 * pl.cdiv(pl.cdiv(B16, 2), 16))   # keep grid >= 2
    return tb, tb * pl.cdiv(B, tb)


def network1_forward(x, params):
    """x: (B, 1, 28, 28) float32 (NCHW). Returns (B, 10) float32."""
    w1, b1, w2, b2, w3, b3 = params
    B = x.shape[0]
    x_flat = x.reshape(B, -1)                        # torch.flatten(x, 1); stays f32
    assert x_flat.shape[1] == D_IN

    TB, B_pad = _choose_tile(B)
    if B_pad != B:
        x_flat = jnp.pad(x_flat, ((0, B_pad - B), (0, 0)))   # tail-tile pad only

    # Lane-pad weights/biases. Zero rows in W2/W3 kill the spurious sigmoid(0)=0.5
    # values produced in the padded hidden columns.
    w1p = _pad2(w1, (D_IN, H1P)).astype(jnp.bfloat16)
    w2p = _pad2(w2, (H1P, H2P)).astype(jnp.bfloat16)
    w3p = _pad2(w3, (H2P, OUTP)).astype(jnp.bfloat16)
    b1p = _pad2(b1, (1, H1P))
    b2p = _pad2(b2, (1, H2P))
    b3p = _pad2(b3, (1, OUTP))

    const = lambda shape: pl.BlockSpec(shape, lambda i: (0, 0))
    # TODO(synk): pipeline_mode=pl.Buffered(1) on the constant-index param specs
    # would save ~0.5 MiB VMEM; omitted to keep lowering maximally portable.

    flops = 2 * B_pad * (D_IN * H1P + H1P * H2P + H2P * OUTP)
    transcendentals = B_pad * (H1P + H2P + OUTP)               # one tanh / element
    bytes_accessed = (x_flat.size * 4                          # f32 x stream
                      + (w1p.size + w2p.size + w3p.size) * 2   # bf16 weights
                      + (b1p.size + b2p.size + b3p.size) * 4   # f32 biases
                      + B_pad * OUTP * 2)                      # bf16 output

    out_padded = pl.pallas_call(
        _mlp_kernel,
        out_shape=jax.ShapeDtypeStruct((B_pad, OUTP), jnp.bfloat16),
        grid=(B_pad // TB,),
        in_specs=[
            pl.BlockSpec((TB, D_IN), lambda i: (i, 0)),   # x: streamed per tile
            const((D_IN, H1P)), const((1, H1P)),          # params: VMEM-resident
            const((H1P, H2P)), const((1, H2P)),
            const((H2P, OUTP)), const((1, OUTP)),
        ],
        out_specs=pl.BlockSpec((TB, OUTP), lambda i: (i, 0)),
        compiler_params=pltpu.CompilerParams(
            dimension_semantics=("parallel",)),
        cost_estimate=pl.CostEstimate(
            flops=flops,
            transcendentals=transcendentals,
            bytes_accessed=bytes_accessed),
    )(x_flat, w1p, b1p, w2p, b2p, w3p, b3p)

    return out_padded[:B, :OUT].astype(jnp.float32)


def init_params(key):
    """Deterministic init mimicking nn.Linear's uniform(-1/sqrt(fan_in), +)."""
    dims = [(D_IN, H1), (H1, H2), (H2, OUT)]
    params = []
    for i, (fan_in, fan_out) in enumerate(dims):
        kw, kb = jax.random.split(jax.random.fold_in(key, i))
        bound = 1.0 / jnp.sqrt(fan_in)
        # stored as (in, out) = transpose of PyTorch's (out, in) weight
        w = jax.random.uniform(kw, (fan_in, fan_out), jnp.float32, -bound, bound)
        b = jax.random.uniform(kb, (1, fan_out), jnp.float32, -bound, bound)
        params += [w, b]
    return tuple(params)


if __name__ == "__main__":
    key = jax.random.PRNGKey(0)
    params = init_params(key)

    # small batch of MNIST-shaped inputs, NCHW like the PyTorch module expects
    x = jax.random.normal(jax.random.fold_in(key, 100), (2, 1, 28, 28), jnp.float32)

    out = network1_forward(x, params)
    out = jax.block_until_ready(out)
    assert out.shape == (2, 10)

    # reference in plain JAX with the same bf16 matmul operands / f32 accumulation
    w1, b1, w2, b2, w3, b3 = params
    ref = x.reshape(x.shape[0], -1).astype(jnp.bfloat16)
    ref = jax.nn.sigmoid(jnp.dot(ref, w1.astype(jnp.bfloat16),
                                 preferred_element_type=jnp.float32) + b1)
    ref = jax.nn.sigmoid(jnp.dot(ref.astype(jnp.bfloat16), w2.astype(jnp.bfloat16),
                                 preferred_element_type=jnp.float32) + b2)
    ref = jax.nn.sigmoid(jnp.dot(ref.astype(jnp.bfloat16), w3.astype(jnp.bfloat16),
                                 preferred_element_type=jnp.float32) + b3)
    # tolerance covers the bf16 output rounding (~4e-3 abs for values near 1.0)
    assert jnp.allclose(out, ref, atol=1e-2, rtol=1e-2), (
        float(jnp.max(jnp.abs(out - ref))))

    print("KERNEL_OK")
</pallas_src>

<mosaic_0001>
module attributes {stable_mosaic.version = 11 : i64} {
  func.func @_mlp_kernel(%arg0: i32, %arg1: memref<16x784xf32, #tpu.memory_space<vmem>>, %arg2: memref<784x256xbf16, #tpu.memory_space<vmem>>, %arg3: memref<1x256xf32, #tpu.memory_space<vmem>>, %arg4: memref<256x128xbf16, #tpu.memory_space<vmem>>, %arg5: memref<1x128xf32, #tpu.memory_space<vmem>>, %arg6: memref<128x128xbf16, #tpu.memory_space<vmem>>, %arg7: memref<1x128xf32, #tpu.memory_space<vmem>>, %arg8: memref<16x128xbf16, #tpu.memory_space<vmem>>) attributes {dimension_semantics = [#tpu.dimension_semantics<parallel>], iteration_bounds = array<i64: 1>, scalar_prefetch = 0 : i64, scratch_operands = 0 : i64, tpu.core_type = #tpu.core_type<tc>, window_params = [{transform_indices = @transform_0, window_bounds = array<i64: 16, 784>}, {pipeline_mode = #tpu.pipeline_mode<synchronous>, transform_indices = @transform_1, window_bounds = array<i64: 784, 256>}, {pipeline_mode = #tpu.pipeline_mode<synchronous>, transform_indices = @transform_2, window_bounds = array<i64: 1, 256>}, {pipeline_mode = #tpu.pipeline_mode<synchronous>, transform_indices = @transform_3, window_bounds = array<i64: 256, 128>}, {pipeline_mode = #tpu.pipeline_mode<synchronous>, transform_indices = @transform_4, window_bounds = array<i64: 1, 128>}, {pipeline_mode = #tpu.pipeline_mode<synchronous>, transform_indices = @transform_5, window_bounds = array<i64: 128, 128>}, {pipeline_mode = #tpu.pipeline_mode<synchronous>, transform_indices = @transform_6, window_bounds = array<i64: 1, 128>}, {transform_indices = @transform_7, window_bounds = array<i64: 16, 128>}]} {
    %c0 = arith.constant 0 : index
    %c0_0 = arith.constant 0 : index
    %0 = vector.load %arg1[%c0, %c0_0] : memref<16x784xf32, #tpu.memory_space<vmem>>, vector<16x784xf32>
    %1 = arith.truncf %0 : vector<16x784xf32> to vector<16x784xbf16>
    %c0_1 = arith.constant 0 : index
    %c0_2 = arith.constant 0 : index
    %2 = vector.load %arg2[%c0_1, %c0_2] : memref<784x256xbf16, #tpu.memory_space<vmem>>, vector<784x256xbf16>
    %cst = arith.constant dense<0.000000e+00> : vector<16x256xf32>
    %3 = tpu.matmul %1, %2, %cst {dimension_numbers = #tpu.dot_dimension_numbers<[1], [0], [0], [1], [0, 0, 1, 1], [], []>} : vector<16x784xbf16>, vector<784x256xbf16>, vector<16x256xf32> -> vector<16x256xf32>
    %c0_3 = arith.constant 0 : index
    %c0_4 = arith.constant 0 : index
    %4 = vector.load %arg3[%c0_3, %c0_4] : memref<1x256xf32, #tpu.memory_space<vmem>>, vector<1x256xf32>
    %5 = vector.broadcast %4 : vector<1x256xf32> to vector<16x256xf32>
    %6 = arith.addf %3, %5 : vector<16x256xf32>
    %cst_5 = arith.constant 5.000000e-01 : f32
    %7 = vector.broadcast %cst_5 : f32 to vector<16x256xf32>
    %8 = arith.mulf %7, %6 : vector<16x256xf32>
    %9 = math.tanh %8 : vector<16x256xf32>
    %cst_6 = arith.constant 1.000000e+00 : f32
    %10 = vector.broadcast %cst_6 : f32 to vector<16x256xf32>
    %11 = arith.addf %9, %10 : vector<16x256xf32>
    %cst_7 = arith.constant 5.000000e-01 : f32
    %12 = vector.broadcast %cst_7 : f32 to vector<16x256xf32>
    %13 = arith.mulf %12, %11 : vector<16x256xf32>
    %14 = arith.truncf %13 : vector<16x256xf32> to vector<16x256xbf16>
    %c0_8 = arith.constant 0 : index
    %c0_9 = arith.constant 0 : index
    %15 = vector.load %arg4[%c0_8, %c0_9] : memref<256x128xbf16, #tpu.memory_space<vmem>>, vector<256x128xbf16>
    %cst_10 = arith.constant dense<0.000000e+00> : vector<16x128xf32>
    %16 = tpu.matmul %14, %15, %cst_10 {dimension_numbers = #tpu.dot_dimension_numbers<[1], [0], [0], [1], [0, 0, 1, 1], [], []>} : vector<16x256xbf16>, vector<256x128xbf16>, vector<16x128xf32> -> vector<16x128xf32>
    %c0_11 = arith.constant 0 : index
    %c0_12 = arith.constant 0 : index
    %17 = vector.load %arg5[%c0_11, %c0_12] : memref<1x128xf32, #tpu.memory_space<vmem>>, vector<1x128xf32>
    %18 = vector.broadcast %17 : vector<1x128xf32> to vector<16x128xf32>
    %19 = arith.addf %16, %18 : vector<16x128xf32>
    %cst_13 = arith.constant 5.000000e-01 : f32
    %20 = vector.broadcast %cst_13 : f32 to vector<16x128xf32>
    %21 = arith.mulf %20, %19 : vector<16x128xf32>
    %22 = math.tanh %21 : vector<16x128xf32>
    %cst_14 = arith.constant 1.000000e+00 : f32
    %23 = vector.broadcast %cst_14 : f32 to vector<16x128xf32>
    %24 = arith.addf %22, %23 : vector<16x128xf32>
    %cst_15 = arith.constant 5.000000e-01 : f32
    %25 = vector.broadcast %cst_15 : f32 to vector<16x128xf32>
    %26 = arith.mulf %25, %24 : vector<16x128xf32>
    %27 = arith.truncf %26 : vector<16x128xf32> to vector<16x128xbf16>
    %c0_16 = arith.constant 0 : index
    %c0_17 = arith.constant 0 : index
    %28 = vector.load %arg6[%c0_16, %c0_17] : memref<128x128xbf16, #tpu.memory_space<vmem>>, vector<128x128xbf16>
    %cst_18 = arith.constant dense<0.000000e+00> : vector<16x128xf32>
    %29 = tpu.matmul %27, %28, %cst_18 {dimension_numbers = #tpu.dot_dimension_numbers<[1], [0], [0], [1], [0, 0, 1, 1], [], []>} : vector<16x128xbf16>, vector<128x128xbf16>, vector<16x128xf32> -> vector<16x128xf32>
    %c0_19 = arith.constant 0 : index
    %c0_20 = arith.constant 0 : index
    %30 = vector.load %arg7[%c0_19, %c0_20] : memref<1x128xf32, #tpu.memory_space<vmem>>, vector<1x128xf32>
    %31 = vector.broadcast %30 : vector<1x128xf32> to vector<16x128xf32>
    %32 = arith.addf %29, %31 : vector<16x128xf32>
    %cst_21 = arith.constant 5.000000e-01 : f32
    %33 = vector.broadcast %cst_21 : f32 to vector<16x128xf32>
    %34 = arith.mulf %33, %32 : vector<16x128xf32>
    %35 = math.tanh %34 : vector<16x128xf32>
    %cst_22 = arith.constant 1.000000e+00 : f32
    %36 = vector.broadcast %cst_22 : f32 to vector<16x128xf32>
    %37 = arith.addf %35, %36 : vector<16x128xf32>
    %cst_23 = arith.constant 5.000000e-01 : f32
    %38 = vector.broadcast %cst_23 : f32 to vector<16x128xf32>
    %39 = arith.mulf %38, %37 : vector<16x128xf32>
    %40 = arith.truncf %39 : vector<16x128xf32> to vector<16x128xbf16>
    %c0_24 = arith.constant 0 : index
    %c0_25 = arith.constant 0 : index
    %41 = vector.load %arg8[%c0_24, %c0_25] : memref<16x128xbf16, #tpu.memory_space<vmem>>, vector<16x128xbf16>
    tpu.vector_store %arg8[%c0_24, %c0_25], %40 {strides = array<i32>} : memref<16x128xbf16, #tpu.memory_space<vmem>>, vector<16x128xbf16>,
    return
  }
  func.func @transform_0(%arg0: i32) -> (i32, i32) {
    %c0_i32 = arith.constant 0 : i32
    %c0_i32_0 = arith.constant 0 : i32
    return %arg0, %c0_i32 : i32, i32
  }
  func.func @transform_1(%arg0: i32) -> (i32, i32) {
    %c0_i32 = arith.constant 0 : i32
    %c0_i32_0 = arith.constant 0 : i32
    %c0_i32_1 = arith.constant 0 : i32
    return %c0_i32, %c0_i32_0 : i32, i32
  }
  func.func @transform_2(%arg0: i32) -> (i32, i32) {
    %c0_i32 = arith.constant 0 : i32
    %c0_i32_0 = arith.constant 0 : i32
    %c0_i32_1 = arith.constant 0 : i32
    return %c0_i32, %c0_i32_0 : i32, i32
  }
  func.func @transform_3(%arg0: i32) -> (i32, i32) {
    %c0_i32 = arith.constant 0 : i32
    %c0_i32_0 = arith.constant 0 : i32
    %c0_i32_1 = arith.constant 0 : i32
    return %c0_i32, %c0_i32_0 : i32, i32
  }
  func.func @transform_4(%arg0: i32) -> (i32, i32) {
    %c0_i32 = arith.constant 0 : i32
    %c0_i32_0 = arith.constant 0 : i32
    %c0_i32_1 = arith.constant 0 : i32
    return %c0_i32, %c0_i32_0 : i32, i32
  }
  func.func @transform_5(%arg0: i32) -> (i32, i32) {
    %c0_i32 = arith.constant 0 : i32
    %c0_i32_0 = arith.constant 0 : i32
    %c0_i32_1 = arith.constant 0 : i32
    return %c0_i32, %c0_i32_0 : i32, i32
  }
  func.func @transform_6(%arg0: i32) -> (i32, i32) {
    %c0_i32 = arith.constant 0 : i32
    %c0_i32_0 = arith.constant 0 : i32
    %c0_i32_1 = arith.constant 0 : i32
    return %c0_i32, %c0_i32_0 : i32, i32
  }
  func.func @transform_7(%arg0: i32) -> (i32, i32) {
    %c0_i32 = arith.constant 0 : i32
    %c0_i32_0 = arith.constant 0 : i32
    return %arg0, %c0_i32 : i32, i32
  }
}

</mosaic_0001>

<llo_original>
// kernel: tpu_custom_call.1
$region0: #{tpu_custom_call.1}
  #allocation0 [shape = 'u32[]', space=smem, size = 0x4, offset = 0x4, fixed_abs, tag = 'smem constant byte address 0x4 - core index']
  #allocation1 [shape = 'u32[72,128]{1,0:T(1,128)}', space=vmem, size = 0x9000, scoped, tag = 'internal scratch']
  %s0 = inlined_call_operand.hbm [shape: f32[16,784], index: 0, kind: input, shape index: {}]
  %s1 = inlined_call_operand.hbm [shape: bf16[784,256], index: 1, kind: input, shape index: {}]
  %s2 = inlined_call_operand.hbm [shape: f32[1,256], index: 2, kind: input, shape index: {}]
  %s3 = inlined_call_operand.hbm [shape: bf16[256,128], index: 3, kind: input, shape index: {}]
  %s4 = inlined_call_operand.vmem [shape: f32[1,128], index: 4, kind: input, shape index: {}]
  %s5 = inlined_call_operand.hbm [shape: bf16[128,128], index: 5, kind: input, shape index: {}]
  %s6 = inlined_call_operand.vmem [shape: f32[1,128], index: 6, kind: input, shape index: {}]
  %s7 = inlined_call_operand.hbm [shape: bf16[16,128], index: 7, kind: output, shape index: {}]
  %s8 = sld [smem:[#allocation0]]
  $region58: #{tpu_custom_call.1} parent=0
    _
  %s10 = ssub.s32 1, %s8
  %s11 = scalar_select 0, %s10, %s8
  $region1: #{tpu_custom_call.1} parent=0
    #allocation2 [shape = 'u8[57344]{0}', space=vmem, size = 0xe000, scoped, tag = 'input window, operand 0, single buffered']
    #allocation3 [shape = 's32[1]{0}', space=sflag, size = 0x4, scoped, tag = 'scoped memory for tpu_custom_call.1']
    #allocation4 [shape = 's32[1]{0}', space=sflag, size = 0x4, scoped, tag = 'scoped memory for tpu_custom_call.1']
    #allocation5 [shape = 'u8[401408]{0}', space=vmem, size = 0x62000, scoped, tag = 'input window, operand 1, single buffered']
    #allocation6 [shape = 's32[1]{0}', space=sflag, size = 0x4, scoped, tag = 'scoped memory for tpu_custom_call.1']
    #allocation7 [shape = 'u8[1024]{0}', space=vmem, size = 0x400, scoped, tag = 'input window, operand 2, single buffered']
    #allocation8 [shape = 'u8[65536]{0}', space=vmem, size = 0x10000, scoped, tag = 'input window, operand 3, single buffered']
    #allocation9 [shape = 's32[1]{0}', space=sflag, size = 0x4, scoped, tag = 'scoped memory for tpu_custom_call.1']
    #allocation10 [shape = 'u8[32768]{0}', space=vmem, size = 0x8000, scoped, tag = 'input window, operand 5, single buffered']
    #allocation11 [shape = 'u8[4096]{0}', space=vmem, size = 0x1000, scoped, tag = 'output window, operand 0, single buffered']
    %12 = vsyncpa [#allocation3], 0
    %13 = vsyncpa [#allocation6], 0
    %14 = vsyncpa [#allocation9], 0
    %15 = vsyncpa [#allocation4], 0
    // Predicated region
    $region2: #{tpu_custom_call.1} parent=1 // pred_check
      _
    $region3: #{tpu_custom_call.1} parent=1 // pred_check_branch
      %17 = sbr.rel (0) target = $region5
    $region4: #{tpu_custom_call.1} parent=1 // pred_region
      %19 = vsyncadd [#allocation3], 0
      %s20 = sshll.u32 %s0, 4
      %s21 = int_to_ptr.hbm [resolvable:$true] %s20
      %s22 = sshll.u32 [#allocation2], 4
      %s23 = int_to_ptr.vmem [resolvable:$true] %s22
      %28 = dma.hbm_to_vmem [thread:$0]  %s21, 1792, %s23, [#allocation3], 896, 896, 56
    $region5: #{tpu_custom_call.1} parent=1 // pred_fallthru
      _
    // Predicated region
    $region6: #{tpu_custom_call.1} parent=1 // pred_check
      _
    $region7: #{tpu_custom_call.1} parent=1 // pred_check_branch
      %30 = sbr.rel (0) target = $region9
    $region8: #{tpu_custom_call.1} parent=1 // pred_region
      %32 = vsyncadd [#allocation6], 0
      %s33 = sshll.u32 %s1, 4
      %s34 = int_to_ptr.hbm [resolvable:$true] %s33
      %s35 = sshll.u32 [#allocation5], 4
      %s36 = int_to_ptr.vmem [resolvable:$true] %s35
      %41 = dma.hbm_to_vmem [thread:$0]  %s34, 12544, %s36, [#allocation6], 128, 128, 8
    $region9: #{tpu_custom_call.1} parent=1 // pred_fallthru
      _
    // Predicated region
    $region10: #{tpu_custom_call.1} parent=1 // pred_check
      _
    $region11: #{tpu_custom_call.1} parent=1 // pred_check_branch
      %43 = sbr.rel (0) target = $region13
    $region12: #{tpu_custom_call.1} parent=1 // pred_region
      %45 = vsyncadd [#allocation6], 0
      %s47 = sshll.u32 %s2, 4
      %s48 = int_to_ptr.hbm [resolvable:$true] %s47
      %s49 = sshll.u32 [#allocation7], 4
      %s50 = int_to_ptr.vmem [resolvable:$true] %s49
      %52 = dma.hbm_to_vmem [thread:$0]  %s48, 32, %s50, [#allocation6]
    $region13: #{tpu_custom_call.1} parent=1 // pred_fallthru
      _
    // Predicated region
    $region14: #{tpu_custom_call.1} parent=1 // pred_check
      _
    $region15: #{tpu_custom_call.1} parent=1 // pred_check_branch
      %54 = sbr.rel (0) target = $region17
    $region16: #{tpu_custom_call.1} parent=1 // pred_region
      %56 = vsyncadd [#allocation9], 0
      %s57 = sshll.u32 %s3, 4
      %s58 = int_to_ptr.hbm [resolvable:$true] %s57
      %s59 = sshll.u32 [#allocation8], 4
      %s60 = int_to_ptr.vmem [resolvable:$true] %s59
      %65 = dma.hbm_to_vmem [thread:$0]  %s58, 2048, %s60, [#allocation9], 64, 64, 4
    $region17: #{tpu_custom_call.1} parent=1 // pred_fallthru
      _
    // Predicated region
    $region18: #{tpu_custom_call.1} parent=1 // pred_check
      _
    $region19: #{tpu_custom_call.1} parent=1 // pred_check_branch
      %67 = sbr.rel (0) target = $region21
    $region20: #{tpu_custom_call.1} parent=1 // pred_region
      _
    $region21: #{tpu_custom_call.1} parent=1 // pred_fallthru
      _
    // Predicated region
    $region22: #{tpu_custom_call.1} parent=1 // pred_check
      _
    $region23: #{tpu_custom_call.1} parent=1 // pred_check_branch
      %69 = sbr.rel (0) target = $region25
    $region24: #{tpu_custom_call.1} parent=1 // pred_region
      %71 = vsyncadd [#allocation9], 0
      %s72 = sshll.u32 %s5, 4
      %s73 = int_to_ptr.hbm [resolvable:$true] %s72
      %s74 = sshll.u32 [#allocation10], 4
      %s75 = int_to_ptr.vmem [resolvable:$true] %s74
      %80 = dma.hbm_to_vmem [thread:$0]  %s73, 1024, %s75, [#allocation9], 64, 64, 4
    $region25: #{tpu_custom_call.1} parent=1 // pred_fallthru
      _
    // Predicated region
    $region26: #{tpu_custom_call.1} parent=1 // pred_check
      _
    $region27: #{tpu_custom_call.1} parent=1 // pred_check_branch
      %82 = sbr.rel (0) target = $region29
    $region28: #{tpu_custom_call.1} parent=1 // pred_region
      _
    $region29: #{tpu_custom_call.1} parent=1 // pred_fallthru
      _
    // Predicated region
    $region30: #{tpu_custom_call.1} parent=1 // pred_check
      _
    $region31: #{tpu_custom_call.1} parent=1 // pred_check_branch
      %84 = sbr.rel (0) target = $region33
    $region32: #{tpu_custom_call.1} parent=1 // pred_region
      %86 = dma.done [#allocation3], 1792
    $region33: #{tpu_custom_call.1} parent=1 // pred_fallthru
      _
    // Predicated region
    $region34: #{tpu_custom_call.1} parent=1 // pred_check
      _
    $region35: #{tpu_custom_call.1} parent=1 // pred_check_branch
      %88 = sbr.rel (0) target = $region37
    $region36: #{tpu_custom_call.1} parent=1 // pred_region
      %90 = dma.done [#allocation6], 12544
    $region37: #{tpu_custom_call.1} parent=1 // pred_fallthru
      _
    // Predicated region
    $region38: #{tpu_custom_call.1} parent=1 // pred_check
      _
    $region39: #{tpu_custom_call.1} parent=1 // pred_check_branch
      %92 = sbr.rel (0) target = $region41
    $region40: #{tpu_custom_call.1} parent=1 // pred_region
      %94 = dma.done [#allocation6], 32
    $region41: #{tpu_custom_call.1} parent=1 // pred_fallthru
      _
    // Predicated region
    $region42: #{tpu_custom_call.1} parent=1 // pred_check
      _
    $region43: #{tpu_custom_call.1} parent=1 // pred_check_branch
      %96 = sbr.rel (0) target = $region45
    $region44: #{tpu_custom_call.1} parent=1 // pred_region
      %98 = dma.done [#allocation9], 2048
    $region45: #{tpu_custom_call.1} parent=1 // pred_fallthru
      _
    // Predicated region
    $region46: #{tpu_custom_call.1} parent=1 // pred_check
      _
    $region47: #{tpu_custom_call.1} parent=1 // pred_check_branch
      %100 = sbr.rel (0) target = $region49
    $region48: #{tpu_custom_call.1} parent=1 // pred_region
      %102 = dma.done [#allocation9], 1024
    $region49: #{tpu_custom_call.1} parent=1 // pred_fallthru
      _
    %v104 = vld [vmem:[#allocation2] sm:$0xff]
    %v105 = vld [vmem:[#allocation2 + $0x8] sm:$0xff]
    %v106 = vld [vmem:[#allocation2 + $0x10] sm:$0xff]
    %v107 = vld [vmem:[#allocation2 + $0x18] sm:$0xff]
    %v108 = vld [vmem:[#allocation2 + $0x20] sm:$0xff]
    %v109 = vld [vmem:[#allocation2 + $0x28] sm:$0xff]
    %v110 = vld [vmem:[#allocation2 + $0x30] sm:$0xff]
    %v111 = vld [vmem:[#allocation2 + $0x38] sm:$0xff]
    %v112 = vld [vmem:[#allocation2 + $0x40] sm:$0xff]
    %v113 = vld [vmem:[#allocation2 + $0x48] sm:$0xff]
    %v114 = vld [vmem:[#allocation2 + $0x50] sm:$0xff]
    %v115 = vld [vmem:[#allocation2 + $0x58] sm:$0xff]
    %v116 = vld [vmem:[#allocation2 + $0x60] sm:$0xff]
    %v117 = vld [vmem:[#allocation2 + $0x68] sm:$0xff]
    %v118 = vpack.c.bf16 %v111, %v104
    %v119 = vpack.c.bf16 %v112, %v105
    %v120 = vpack.c.bf16 %v113, %v106
    %v121 = vpack.c.bf16 %v114, %v107
    %v122 = vpack.c.bf16 %v115, %v108
    %v123 = vpack.c.bf16 %v116, %v109
    %v124 = vpack.c.bf16 %v117, %v110
    %v125 = vld [vmem:[#allocation5] sm:$0xff]
    %v126 = vld [vmem:[#allocation5 + $0x8] sm:$0xff]
    %v127 = vld [vmem:[#allocation5 + $0x10] sm:$0xff]
    %v128 = vld [vmem:[#allocation5 + $0x18] sm:$0xff]
    %v129 = vld [vmem:[#allocation5 + $0x20] sm:$0xff]
    %v130 = vld [vmem:[#allocation5 + $0x28] sm:$0xff]
    %v131 = vld [vmem:[#allocation5 + $0x30] sm:$0xff]
    %v132 = vld [vmem:[#allocation5 + $0x38] sm:$0xff]
    %v133 = vld [vmem:[#allocation5 + $0x40] sm:$0xff]
    %v134 = vld [vmem:[#allocation5 + $0x48] sm:$0xff]
    %v135 = vld [vmem:[#allocation5 + $0x50] sm:$0xff]
    %v136 = vld [vmem:[#allocation5 + $0x58] sm:$0xff]
    %v137 = vld [vmem:[#allocation5 + $0x60] sm:$0xff]
    %v138 = vld [vmem:[#allocation5 + $0x68] sm:$0xff]
    %v139 = vld [vmem:[#allocation5 + $0x70] sm:$0xff]
    %v140 = vld [vmem:[#allocation5 + $0x78] sm:$0xff]
    %v141 = vld [vmem:[#allocation5 + $0x80] sm:$0xff]
    %v142 = vld [vmem:[#allocation5 + $0x88] sm:$0xff]
    %v143 = vld [vmem:[#allocation5 + $0x90] sm:$0xff]
    %v144 = vld [vmem:[#allocation5 + $0x98] sm:$0xff]
    %v145 = vld [vmem:[#allocation5 + $0xa0] sm:$0xff]
    %v146 = vld [vmem:[#allocation5 + $0xa8] sm:$0xff]
    %v147 = vld [vmem:[#allocation5 + $0xb0] sm:$0xff]
    %v148 = vld [vmem:[#allocation5 + $0xb8] sm:$0xff]
    %v149 = vld [vmem:[#allocation5 + $0xc0] sm:$0xff]
    %v150 = vld [vmem:[#allocation5 + $0xc8] sm:$0xff]
    %v151 = vld [vmem:[#allocation5 + $0xd0] sm:$0xff]
    %v152 = vld [vmem:[#allocation5 + $0xd8] sm:$0xff]
    %v153 = vld [vmem:[#allocation5 + $0xe0] sm:$0xff]
    %v154 = vld [vmem:[#allocation5 + $0xe8] sm:$0xff]
    %v155 = vld [vmem:[#allocation5 + $0xf0] sm:$0xff]
    %v156 = vld [vmem:[#allocation5 + $0xf8] sm:$0xff]
    %v157 = vld [vmem:[#allocation5 + $0x100] sm:$0xff]
    %v158 = vld [vmem:[#allocation5 + $0x108] sm:$0xff]
    %v159 = vld [vmem:[#allocation5 + $0x110] sm:$0xff]
    %v160 = vld [vmem:[#allocation5 + $0x118] sm:$0xff]
    %v161 = vld [vmem:[#allocation5 + $0x120] sm:$0xff]
    %v162 = vld [vmem:[#allocation5 + $0x128] sm:$0xff]
    %v163 = vld [vmem:[#allocation5 + $0x130] sm:$0xff]
    %v164 = vld [vmem:[#allocation5 + $0x138] sm:$0xff]
    %v165 = vld [vmem:[#allocation5 + $0x140] sm:$0xff]
    %v166 = vld [vmem:[#allocation5 + $0x148] sm:$0xff]
    %v167 = vld [vmem:[#allocation5 + $0x150] sm:$0xff]
    %v168 = vld [vmem:[#allocation5 + $0x158] sm:$0xff]
    %v169 = vld [vmem:[#allocation5 + $0x160] sm:$0xff]
    %v170 = vld [vmem:[#allocation5 + $0x168] sm:$0xff]
    %v171 = vld [vmem:[#allocation5 + $0x170] sm:$0xff]
    %v172 = vld [vmem:[#allocation5 + $0x178] sm:$0xff]
    %v173 = vld [vmem:[#allocation5 + $0x180] sm:$0xff]
    %v174 = vld [vmem:[#allocation5 + $0x188] sm:$0xff]
    %v175 = vld [vmem:[#allocation5 + $0x190] sm:$0xff]
    %v176 = vld [vmem:[#allocation5 + $0x198] sm:$0xff]
    %v177 = vld [vmem:[#allocation5 + $0x1a0] sm:$0xff]
    %v178 = vld [vmem:[#allocation5 + $0x1a8] sm:$0xff]
    %v179 = vld [vmem:[#allocation5 + $0x1b0] sm:$0xff]
    %v180 = vld [vmem:[#allocation5 + $0x1b8] sm:$0xff]
    %v181 = vld [vmem:[#allocation5 + $0x1c0] sm:$0xff]
    %v182 = vld [vmem:[#allocation5 + $0x1c8] sm:$0xff]
    %v183 = vld [vmem:[#allocation5 + $0x1d0] sm:$0xff]
    %v184 = vld [vmem:[#allocation5 + $0x1d8] sm:$0xff]
    %v185 = vld [vmem:[#allocation5 + $0x1e0] sm:$0xff]
    %v186 = vld [vmem:[#allocation5 + $0x1e8] sm:$0xff]
    %v187 = vld [vmem:[#allocation5 + $0x1f0] sm:$0xff]
    %v188 = vld [vmem:[#allocation5 + $0x1f8] sm:$0xff]
    %v189 = vld [vmem:[#allocation5 + $0x200] sm:$0xff]
    %v190 = vld [vmem:[#allocation5 + $0x208] sm:$0xff]
    %v191 = vld [vmem:[#allocation5 + $0x210] sm:$0xff]
    %v192 = vld [vmem:[#allocation5 + $0x218] sm:$0xff]
    %v193 = vld [vmem:[#allocation5 + $0x220] sm:$0xff]
    %v194 = vld [vmem:[#allocation5 + $0x228] sm:$0xff]
    %v195 = vld [vmem:[#allocation5 + $0x230] sm:$0xff]
    %v196 = vld [vmem:[#allocation5 + $0x238] sm:$0xff]
    %v197 = vld [vmem:[#allocation5 + $0x240] sm:$0xff]
    %v198 = vld [vmem:[#allocation5 + $0x248] sm:$0xff]
    %v199 = vld [vmem:[#allocation5 + $0x250] sm:$0xff]
    %v200 = vld [vmem:[#allocation5 + $0x258] sm:$0xff]
    %v201 = vld [vmem:[#allocation5 + $0x260] sm:$0xff]
    %v202 = vld [vmem:[#allocation5 + $0x268] sm:$0xff]
    %v203 = vld [vmem:[#allocation5 + $0x270] sm:$0xff]
    %v204 = vld [vmem:[#allocation5 + $0x278] sm:$0xff]
    %v205 = vld [vmem:[#allocation5 + $0x280] sm:$0xff]
    %v206 = vld [vmem:[#allocation5 + $0x288] sm:$0xff]
    %v207 = vld [vmem:[#allocation5 + $0x290] sm:$0xff]
    %v208 = vld [vmem:[#allocation5 + $0x298] sm:$0xff]
    %v209 = vld [vmem:[#allocation5 + $0x2a0] sm:$0xff]
    %v210 = vld [vmem:[#allocation5 + $0x2a8] sm:$0xff]
    %v211 = vld [vmem:[#allocation5 + $0x2b0] sm:$0xff]
    %v212 = vld [vmem:[#allocation5 + $0x2b8] sm:$0xff]
    %v213 = vld [vmem:[#allocation5 + $0x2c0] sm:$0xff]
    %v214 = vld [vmem:[#allocation5 + $0x2c8] sm:$0xff]
    %v215 = vld [vmem:[#allocation5 + $0x2d0] sm:$0xff]
    %v216 = vld [vmem:[#allocation5 + $0x2d8] sm:$0xff]
    %v217 = vld [vmem:[#allocation5 + $0x2e0] sm:$0xff]
    %v218 = vld [vmem:[#allocation5 + $0x2e8] sm:$0xff]
    %v219 = vld [vmem:[#allocation5 + $0x2f0] sm:$0xff]
    %v220 = vld [vmem:[#allocation5 + $0x2f8] sm:$0xff]
    %v221 = vld [vmem:[#allocation5 + $0x300] sm:$0xff]
    %v222 = vld [vmem:[#allocation5 + $0x308] sm:$0xff]
    %v223 = vld [vmem:[#allocation7] sm:$0x3]
    %v225 = vperm.slane %v223, 0
    %v226 = vperm.slane %v223, 1
    %v327 = vunpack.c.l.b16 %v125
    %v328 = vunpack.c.h.b16 %v125
    %v329 = vunpack.c.l.b16 %v126
    %v330 = vunpack.c.h.b16 %v126
    %v331 = vunpack.c.l.b16 %v127
    %v332 = vunpack.c.h.b16 %v127
    %v333 = vunpack.c.l.b16 %v128
    %v334 = vunpack.c.h.b16 %v128
    %v335 = vunpack.c.l.b16 %v129
    %v336 = vunpack.c.h.b16 %v129
    %v337 = vunpack.c.l.b16 %v130
    %v338 = vunpack.c.h.b16 %v130
    %v339 = vunpack.c.l.b16 %v131
    %v340 = vunpack.c.h.b16 %v131
    %v341 = vunpack.c.l.b16 %v132
    %v342 = vunpack.c.h.b16 %v132
    %v343 = vunpack.c.l.b16 %v133
    %v344 = vunpack.c.h.b16 %v133
    %v345 = vunpack.c.l.b16 %v134
    %v346 = vunpack.c.h.b16 %v134
    %v347 = vunpack.c.l.b16 %v135
    %v348 = vunpack.c.h.b16 %v135
    %v349 = vunpack.c.l.b16 %v136
    %v350 = vunpack.c.h.b16 %v136
    %v351 = vunpack.c.l.b16 %v137
    %v352 = vunpack.c.h.b16 %v137
    %v353 = vunpack.c.l.b16 %v138
    %v354 = vunpack.c.h.b16 %v138
    %v355 = vunpack.c.l.b16 %v139
    %v356 = vunpack.c.h.b16 %v139
    %v357 = vunpack.c.l.b16 %v140
    %v358 = vunpack.c.h.b16 %v140
    %v359 = vunpack.c.l.b16 %v141
    %v360 = vunpack.c.h.b16 %v141
    %v361 = vunpack.c.l.b16 %v142
    %v362 = vunpack.c.h.b16 %v142
    %v363 = vunpack.c.l.b16 %v143
    %v364 = vunpack.c.h.b16 %v143
    %v365 = vunpack.c.l.b16 %v144
    %v366 = vunpack.c.h.b16 %v144
    %v367 = vunpack.c.l.b16 %v145
    %v368 = vunpack.c.h.b16 %v145
    %v369 = vunpack.c.l.b16 %v146
    %v370 = vunpack.c.h.b16 %v146
    %v371 = vunpack.c.l.b16 %v147
    %v372 = vunpack.c.h.b16 %v147
    %v373 = vunpack.c.l.b16 %v148
    %v374 = vunpack.c.h.b16 %v148
    %v375 = vunpack.c.l.b16 %v149
    %v376 = vunpack.c.h.b16 %v149
    %v377 = vunpack.c.l.b16 %v150
    %v378 = vunpack.c.h.b16 %v150
    %v379 = vunpack.c.l.b16 %v151
    %v380 = vunpack.c.h.b16 %v151
    %v381 = vunpack.c.l.b16 %v152
    %v382 = vunpack.c.h.b16 %v152
    %v383 = vunpack.c.l.b16 %v153
    %v384 = vunpack.c.h.b16 %v153
    %v385 = vunpack.c.l.b16 %v154
    %v386 = vunpack.c.h.b16 %v154
    %v387 = vunpack.c.l.b16 %v155
    %v388 = vunpack.c.h.b16 %v155
    %v389 = vunpack.c.l.b16 %v156
    %v390 = vunpack.c.h.b16 %v156
    %v391 = vunpack.c.l.b16 %v157
    %v392 = vunpack.c.h.b16 %v157
    %v393 = vunpack.c.l.b16 %v158
    %v394 = vunpack.c.h.b16 %v158
    %v395 = vunpack.c.l.b16 %v159
    %v396 = vunpack.c.h.b16 %v159
    %v397 = vunpack.c.l.b16 %v160
    %v398 = vunpack.c.h.b16 %v160
    %v399 = vunpack.c.l.b16 %v161
    %v400 = vunpack.c.h.b16 %v161
    %v401 = vunpack.c.l.b16 %v162
    %v402 = vunpack.c.h.b16 %v162
    %v403 = vunpack.c.l.b16 %v163
    %v404 = vunpack.c.h.b16 %v163
    %v405 = vunpack.c.l.b16 %v164
    %v406 = vunpack.c.h.b16 %v164
    %v407 = vunpack.c.l.b16 %v165
    %v408 = vunpack.c.h.b16 %v165
    %v409 = vunpack.c.l.b16 %v166
    %v410 = vunpack.c.h.b16 %v166
    %v411 = vunpack.c.l.b16 %v167
    %v412 = vunpack.c.h.b16 %v167
    %v413 = vunpack.c.l.b16 %v168
    %v414 = vunpack.c.h.b16 %v168
    %v415 = vunpack.c.l.b16 %v169
    %v416 = vunpack.c.h.b16 %v169
    %v417 = vunpack.c.l.b16 %v170
    %v418 = vunpack.c.h.b16 %v170
    %v419 = vunpack.c.l.b16 %v171
    %v420 = vunpack.c.h.b16 %v171
    %v421 = vunpack.c.l.b16 %v172
    %v422 = vunpack.c.h.b16 %v172
    %v423 = vunpack.c.l.b16 %v173
    %v424 = vunpack.c.h.b16 %v173
    %v425 = vunpack.c.l.b16 %v174
    %v426 = vunpack.c.h.b16 %v174
    %v427 = vunpack.c.l.b16 %v175
    %v428 = vunpack.c.h.b16 %v175
    %v429 = vunpack.c.l.b16 %v176
    %v430 = vunpack.c.h.b16 %v176
    %v431 = vunpack.c.l.b16 %v177
    %v432 = vunpack.c.h.b16 %v177
    %v433 = vunpack.c.l.b16 %v178
    %v434 = vunpack.c.h.b16 %v178
    %v435 = vunpack.c.l.b16 %v179
    %v436 = vunpack.c.h.b16 %v179
    %v437 = vunpack.c.l.b16 %v180
    %v438 = vunpack.c.h.b16 %v180
    %v439 = vunpack.c.l.b16 %v181
    %v440 = vunpack.c.h.b16 %v181
    %v441 = vunpack.c.l.b16 %v182
    %v442 = vunpack.c.h.b16 %v182
    %v443 = vunpack.c.l.b16 %v183
    %v444 = vunpack.c.h.b16 %v183
    %v445 = vunpack.c.l.b16 %v184
    %v446 = vunpack.c.h.b16 %v184
    %v447 = vunpack.c.l.b16 %v185
    %v448 = vunpack.c.h.b16 %v185
    %v449 = vunpack.c.l.b16 %v186
    %v450 = vunpack.c.h.b16 %v186
    %v451 = vunpack.c.l.b16 %v187
    %v452 = vunpack.c.h.b16 %v187
    %v453 = vunpack.c.l.b16 %v188
    %v454 = vunpack.c.h.b16 %v188
    %v455 = vunpack.c.l.b16 %v189
    %v456 = vunpack.c.h.b16 %v189
    %v457 = vunpack.c.l.b16 %v190
    %v458 = vunpack.c.h.b16 %v190
    %v459 = vunpack.c.l.b16 %v191
    %v460 = vunpack.c.h.b16 %v191
    %v461 = vunpack.c.l.b16 %v192
    %v462 = vunpack.c.h.b16 %v192
    %v463 = vunpack.c.l.b16 %v193
    %v464 = vunpack.c.h.b16 %v193
    %v465 = vunpack.c.l.b16 %v194
    %v466 = vunpack.c.h.b16 %v194
    %v467 = vunpack.c.l.b16 %v195
    %v468 = vunpack.c.h.b16 %v195
    %v469 = vunpack.c.l.b16 %v196
    %v470 = vunpack.c.h.b16 %v196
    %v471 = vunpack.c.l.b16 %v197
    %v472 = vunpack.c.h.b16 %v197
    %v473 = vunpack.c.l.b16 %v198
    %v474 = vunpack.c.h.b16 %v198
    %v475 = vunpack.c.l.b16 %v199
    %v476 = vunpack.c.h.b16 %v199
    %v477 = vunpack.c.l.b16 %v200
    %v478 = vunpack.c.h.b16 %v200
    %v479 = vunpack.c.l.b16 %v201
    %v480 = vunpack.c.h.b16 %v201
    %v481 = vunpack.c.l.b16 %v202
    %v482 = vunpack.c.h.b16 %v202
    %v483 = vunpack.c.l.b16 %v203
    %v484 = vunpack.c.h.b16 %v203
    %v485 = vunpack.c.l.b16 %v204
    %v486 = vunpack.c.h.b16 %v204
    %v487 = vunpack.c.l.b16 %v205
    %v488 = vunpack.c.h.b16 %v205
    %v489 = vunpack.c.l.b16 %v206
    %v490 = vunpack.c.h.b16 %v206
    %v491 = vunpack.c.l.b16 %v207
    %v492 = vunpack.c.h.b16 %v207
    %v493 = vunpack.c.l.b16 %v208
    %v494 = vunpack.c.h.b16 %v208
    %v495 = vunpack.c.l.b16 %v209
    %v496 = vunpack.c.h.b16 %v209
    %v497 = vunpack.c.l.b16 %v210
    %v498 = vunpack.c.h.b16 %v210
    %v499 = vunpack.c.l.b16 %v211
    %v500 = vunpack.c.h.b16 %v211
    %v501 = vunpack.c.l.b16 %v212
    %v502 = vunpack.c.h.b16 %v212
    %v503 = vunpack.c.l.b16 %v213
    %v504 = vunpack.c.h.b16 %v213
    %v505 = vunpack.c.l.b16 %v214
    %v506 = vunpack.c.h.b16 %v214
    %v507 = vunpack.c.l.b16 %v215
    %v508 = vunpack.c.h.b16 %v215
    %v509 = vunpack.c.l.b16 %v216
    %v510 = vunpack.c.h.b16 %v216
    %v511 = vunpack.c.l.b16 %v217
    %v512 = vunpack.c.h.b16 %v217
    %v513 = vunpack.c.l.b16 %v218
    %v514 = vunpack.c.h.b16 %v218
    %v515 = vunpack.c.l.b16 %v219
    %v516 = vunpack.c.h.b16 %v219
    %v517 = vunpack.c.l.b16 %v220
    %v518 = vunpack.c.h.b16 %v220
    %v519 = vunpack.c.l.b16 %v221
    %v520 = vunpack.c.h.b16 %v221
    %v521 = vunpack.c.l.b16 %v222
    %v522 = vunpack.c.h.b16 %v222
    %v523 = vpack.c.b16 %v329, %v327
    %v524 = vpack.c.b16 %v330, %v328
    %v525 = vpack.c.b16 %v333, %v331
    %v526 = vpack.c.b16 %v334, %v332
    %v527 = vpack.c.b16 %v337, %v335
    %v528 = vpack.c.b16 %v338, %v336
    %v529 = vpack.c.b16 %v341, %v339
    %v530 = vpack.c.b16 %v342, %v340
    %v531 = vpack.c.b16 %v345, %v343
    %v532 = vpack.c.b16 %v346, %v344
    %v533 = vpack.c.b16 %v349, %v347
    %v534 = vpack.c.b16 %v350, %v348
    %v535 = vpack.c.b16 %v353, %v351
    %v536 = vpack.c.b16 %v354, %v352
    %v537 = vpack.c.b16 %v357, %v355
    %v538 = vpack.c.b16 %v358, %v356
    %v539 = vpack.c.b16 %v361, %v359
    %v540 = vpack.c.b16 %v362, %v360
    %v541 = vpack.c.b16 %v365, %v363
    %v542 = vpack.c.b16 %v366, %v364
    %v543 = vpack.c.b16 %v369, %v367
    %v544 = vpack.c.b16 %v370, %v368
    %v545 = vpack.c.b16 %v373, %v371
    %v546 = vpack.c.b16 %v374, %v372
    %v547 = vpack.c.b16 %v377, %v375
    %v548 = vpack.c.b16 %v378, %v376
    %v549 = vpack.c.b16 %v381, %v379
    %v550 = vpack.c.b16 %v382, %v380
    %v551 = vpack.c.b16 %v385, %v383
    %v552 = vpack.c.b16 %v386, %v384
    %v553 = vpack.c.b16 %v389, %v387
    %v554 = vpack.c.b16 %v390, %v388
    %v555 = vpack.c.b16 %v393, %v391
    %v556 = vpack.c.b16 %v394, %v392
    %v557 = vpack.c.b16 %v397, %v395
    %v558 = vpack.c.b16 %v398, %v396
    %v559 = vpack.c.b16 %v401, %v399
    %v560 = vpack.c.b16 %v402, %v400
    %v561 = vpack.c.b16 %v405, %v403
    %v562 = vpack.c.b16 %v406, %v404
    %v563 = vpack.c.b16 %v409, %v407
    %v564 = vpack.c.b16 %v410, %v408
    %v565 = vpack.c.b16 %v413, %v411
    %v566 = vpack.c.b16 %v414, %v412
    %v567 = vpack.c.b16 %v417, %v415
    %v568 = vpack.c.b16 %v418, %v416
    %v569 = vpack.c.b16 %v421, %v419
    %v570 = vpack.c.b16 %v422, %v420
    %v571 = vpack.c.b16 %v425, %v423
    %v572 = vpack.c.b16 %v426, %v424
    %v573 = vpack.c.b16 %v429, %v427
    %v574 = vpack.c.b16 %v430, %v428
    %v575 = vpack.c.b16 %v433, %v431
    %v576 = vpack.c.b16 %v434, %v432
    %v577 = vpack.c.b16 %v437, %v435
    %v578 = vpack.c.b16 %v438, %v436
    %v579 = vpack.c.b16 %v441, %v439
    %v580 = vpack.c.b16 %v442, %v440
    %v581 = vpack.c.b16 %v445, %v443
    %v582 = vpack.c.b16 %v446, %v444
    %v583 = vpack.c.b16 %v449, %v447
    %v584 = vpack.c.b16 %v450, %v448
    %v585 = vpack.c.b16 %v453, %v451
    %v586 = vpack.c.b16 %v454, %v452
    %v587 = vpack.c.b16 %v457, %v455
    %v588 = vpack.c.b16 %v458, %v456
    %v589 = vpack.c.b16 %v461, %v459
    %v590 = vpack.c.b16 %v462, %v460
    %v591 = vpack.c.b16 %v465, %v463
    %v592 = vpack.c.b16 %v466, %v464
    %v593 = vpack.c.b16 %v469, %v467
    %v594 = vpack.c.b16 %v470, %v468
    %v595 = vpack.c.b16 %v473, %v471
    %v596 = vpack.c.b16 %v474, %v472
    %v597 = vpack.c.b16 %v477, %v475
    %v598 = vpack.c.b16 %v478, %v476
    %v599 = vpack.c.b16 %v481, %v479
    %v600 = vpack.c.b16 %v482, %v480
    %v601 = vpack.c.b16 %v485, %v483
    %v602 = vpack.c.b16 %v486, %v484
    %v603 = vpack.c.b16 %v489, %v487
    %v604 = vpack.c.b16 %v490, %v488
    %v605 = vpack.c.b16 %v493, %v491
    %v606 = vpack.c.b16 %v494, %v492
    %v607 = vpack.c.b16 %v497, %v495
    %v608 = vpack.c.b16 %v498, %v496
    %v609 = vpack.c.b16 %v501, %v499
    %v610 = vpack.c.b16 %v502, %v500
    %v611 = vpack.c.b16 %v505, %v503
    %v612 = vpack.c.b16 %v506, %v504
    %v613 = vpack.c.b16 %v509, %v507
    %v614 = vpack.c.b16 %v510, %v508
    %v615 = vpack.c.b16 %v513, %v511
    %v616 = vpack.c.b16 %v514, %v512
    %v617 = vpack.c.b16 %v517, %v515
    %v618 = vpack.c.b16 %v518, %v516
    %v619 = vpack.c.b16 %v521, %v519
    %v620 = vpack.c.b16 %v522, %v520
    %vm719 = vcmask 130048
    %v721 = vsel %vm719, %v124, 0
    %723 = vmatpush.bf16.msra.mxu0 %v537
    %724 = vmatpush.bf16.msra.mxu0 %v535
    %725 = vmatpush.bf16.msra.mxu0 %v533
    %726 = vmatpush.bf16.msra.mxu0 %v531
    %727 = vmatpush.bf16.msra.mxu0 %v529
    %728 = vmatpush.bf16.msra.mxu0 %v527
    %729 = vmatpush.bf16.msra.mxu0 %v525
    %730 = vmatpush.bf16.msra.mxu0 %v523
    %731 = vmatmul.bf16.gmra.mxu0 %v118
    %v732 = vpop.f32.mrf.mxu0
    %v733 = vadd.f32 %v225, %v732
    %v734 = vpop.f32.mrf.mxu0
    %v735 = vadd.f32 %v225, %v734
    %736 = vdwg.mxu0
    %737 = vmatpush.bf16.msra.mxu0 %v553
    %738 = vmatpush.bf16.msra.mxu0 %v551
    %739 = vmatpush.bf16.msra.mxu0 %v549
    %740 = vmatpush.bf16.msra.mxu0 %v547
    %741 = vmatpush.bf16.msra.mxu0 %v545
    %742 = vmatpush.bf16.msra.mxu0 %v543
    %743 = vmatpush.bf16.msra.mxu0 %v541
    %744 = vmatpush.bf16.msra.mxu0 %v539
    %745 = vmatmul.bf16.gmra.mxu0 %v119
    %v746 = vpop.f32.mrf.mxu0
    %v747 = vadd.f32 %v733, %v746
    %v748 = vpop.f32.mrf.mxu0
    %v749 = vadd.f32 %v735, %v748
    %750 = vdwg.mxu0
    %751 = vmatpush.bf16.msra.mxu0 %v569
    %752 = vmatpush.bf16.msra.mxu0 %v567
    %753 = vmatpush.bf16.msra.mxu0 %v565
    %754 = vmatpush.bf16.msra.mxu0 %v563
    %755 = vmatpush.bf16.msra.mxu0 %v561
    %756 = vmatpush.bf16.msra.mxu0 %v559
    %757 = vmatpush.bf16.msra.mxu0 %v557
    %758 = vmatpush.bf16.msra.mxu0 %v555
    %759 = vmatmul.bf16.gmra.mxu0 %v120
    %v760 = vpop.f32.mrf.mxu0
    %v761 = vadd.f32 %v747, %v760
    %v762 = vpop.f32.mrf.mxu0
    %v763 = vadd.f32 %v749, %v762
    %764 = vdwg.mxu0
    %765 = vmatpush.bf16.msra.mxu0 %v585
    %766 = vmatpush.bf16.msra.mxu0 %v583
    %767 = vmatpush.bf16.msra.mxu0 %v581
    %768 = vmatpush.bf16.msra.mxu0 %v579
    %769 = vmatpush.bf16.msra.mxu0 %v577
    %770 = vmatpush.bf16.msra.mxu0 %v575
    %771 = vmatpush.bf16.msra.mxu0 %v573
    %772 = vmatpush.bf16.msra.mxu0 %v571
    %773 = vmatmul.bf16.gmra.mxu0 %v121
    %v774 = vpop.f32.mrf.mxu0
    %v775 = vadd.f32 %v761, %v774
    %v776 = vpop.f32.mrf.mxu0
    %v777 = vadd.f32 %v763, %v776
    %778 = vdwg.mxu0
    %779 = vmatpush.bf16.msra.mxu0 %v601
    %780 = vmatpush.bf16.msra.mxu0 %v599
    %781 = vmatpush.bf16.msra.mxu0 %v597
    %782 = vmatpush.bf16.msra.mxu0 %v595
    %783 = vmatpush.bf16.msra.mxu0 %v593
    %784 = vmatpush.bf16.msra.mxu0 %v591
    %785 = vmatpush.bf16.msra.mxu0 %v589
    %786 = vmatpush.bf16.msra.mxu0 %v587
    %787 = vmatmul.bf16.gmra.mxu0 %v122
    %v788 = vpop.f32.mrf.mxu0
    %v789 = vadd.f32 %v775, %v788
    %v790 = vpop.f32.mrf.mxu0
    %v791 = vadd.f32 %v777, %v790
    %792 = vdwg.mxu0
    %793 = vmatpush.bf16.msra.mxu0 %v617
    %794 = vmatpush.bf16.msra.mxu0 %v615
    %795 = vmatpush.bf16.msra.mxu0 %v613
    %796 = vmatpush.bf16.msra.mxu0 %v611
    %797 = vmatpush.bf16.msra.mxu0 %v609
    %798 = vmatpush.bf16.msra.mxu0 %v607
    %799 = vmatpush.bf16.msra.mxu0 %v605
    %800 = vmatpush.bf16.msra.mxu0 %v603
    %801 = vmatmul.bf16.gmra.mxu0 %v123
    %v802 = vpop.f32.mrf.mxu0
    %v803 = vadd.f32 %v789, %v802
    %v804 = vpop.f32.mrf.mxu0
    %v805 = vadd.f32 %v791, %v804
    %806 = vdwg.mxu0
    %807 = vmatpush.bf16.msra.mxu0 0
    %808 = vmatpush.bf16.msra.mxu0 0
    %809 = vmatpush.bf16.msra.mxu0 0
    %810 = vmatpush.bf16.msra.mxu0 0
    %811 = vmatpush.bf16.msra.mxu0 0
    %812 = vmatpush.bf16.msra.mxu0 0
    %813 = vmatpush.bf16.msra.mxu0 0
    %814 = vmatpush.bf16.msra.mxu0 %v619
    %815 = vmatmul.bf16.gmra.mxu0 %v721
    %v816 = vpop.f32.mrf.mxu0
    %v817 = vadd.f32 %v803, %v816
    %v818 = vpop.f32.mrf.mxu0
    %v819 = vadd.f32 %v805, %v818
    %820 = vdwg.mxu0
    %821 = vmatpush.bf16.msra.mxu0 %v538
    %822 = vmatpush.bf16.msra.mxu0 %v536
    %823 = vmatpush.bf16.msra.mxu0 %v534
    %824 = vmatpush.bf16.msra.mxu0 %v532
    %825 = vmatpush.bf16.msra.mxu0 %v530
    %826 = vmatpush.bf16.msra.mxu0 %v528
    %827 = vmatpush.bf16.msra.mxu0 %v526
    %828 = vmatpush.bf16.msra.mxu0 %v524
    %829 = vmatmul.bf16.gmra.mxu0 %v118
    %v830 = vpop.f32.mrf.mxu0
    %v831 = vadd.f32 %v226, %v830
    %v832 = vpop.f32.mrf.mxu0
    %v833 = vadd.f32 %v226, %v832
    %834 = vdwg.mxu0
    %835 = vmatpush.bf16.msra.mxu0 %v554
    %836 = vmatpush.bf16.msra.mxu0 %v552
    %837 = vmatpush.bf16.msra.mxu0 %v550
    %838 = vmatpush.bf16.msra.mxu0 %v548
    %839 = vmatpush.bf16.msra.mxu0 %v546
    %840 = vmatpush.bf16.msra.mxu0 %v544
    %841 = vmatpush.bf16.msra.mxu0 %v542
    %842 = vmatpush.bf16.msra.mxu0 %v540
    %843 = vmatmul.bf16.gmra.mxu0 %v119
    %v844 = vpop.f32.mrf.mxu0
    %v845 = vadd.f32 %v831, %v844
    %v846 = vpop.f32.mrf.mxu0
    %v847 = vadd.f32 %v833, %v846
    %848 = vdwg.mxu0
    %849 = vmatpush.bf16.msra.mxu0 %v570
    %850 = vmatpush.bf16.msra.mxu0 %v568
    %851 = vmatpush.bf16.msra.mxu0 %v566
    %852 = vmatpush.bf16.msra.mxu0 %v564
    %853 = vmatpush.bf16.msra.mxu0 %v562
    %854 = vmatpush.bf16.msra.mxu0 %v560
    %855 = vmatpush.bf16.msra.mxu0 %v558
    %856 = vmatpush.bf16.msra.mxu0 %v556
    %857 = vmatmul.bf16.gmra.mxu0 %v120
    %v858 = vpop.f32.mrf.mxu0
    %v859 = vadd.f32 %v845, %v858
    %v860 = vpop.f32.mrf.mxu0
    %v861 = vadd.f32 %v847, %v860
    %862 = vdwg.mxu0
    %863 = vmatpush.bf16.msra.mxu0 %v586
    %864 = vmatpush.bf16.msra.mxu0 %v584
    %865 = vmatpush.bf16.msra.mxu0 %v582
    %866 = vmatpush.bf16.msra.mxu0 %v580
    %867 = vmatpush.bf16.msra.mxu0 %v578
    %868 = vmatpush.bf16.msra.mxu0 %v576
    %869 = vmatpush.bf16.msra.mxu0 %v574
    %870 = vmatpush.bf16.msra.mxu0 %v572
    %871 = vmatmul.bf16.gmra.mxu0 %v121
    %v872 = vpop.f32.mrf.mxu0
    %v873 = vadd.f32 %v859, %v872
    %v874 = vpop.f32.mrf.mxu0
    %v875 = vadd.f32 %v861, %v874
    %876 = vdwg.mxu0
    %877 = vmatpush.bf16.msra.mxu0 %v602
    %878 = vmatpush.bf16.msra.mxu0 %v600
    %879 = vmatpush.bf16.msra.mxu0 %v598
    %880 = vmatpush.bf16.msra.mxu0 %v596
    %881 = vmatpush.bf16.msra.mxu0 %v594
    %882 = vmatpush.bf16.msra.mxu0 %v592
    %883 = vmatpush.bf16.msra.mxu0 %v590
    %884 = vmatpush.bf16.msra.mxu0 %v588
    %885 = vmatmul.bf16.gmra.mxu0 %v122
    %v886 = vpop.f32.mrf.mxu0
    %v887 = vadd.f32 %v873, %v886
    %v888 = vpop.f32.mrf.mxu0
    %v889 = vadd.f32 %v875, %v888
    %890 = vdwg.mxu0
    %891 = vmatpush.bf16.msra.mxu0 %v618
    %892 = vmatpush.bf16.msra.mxu0 %v616
    %893 = vmatpush.bf16.msra.mxu0 %v614
    %894 = vmatpush.bf16.msra.mxu0 %v612
    %895 = vmatpush.bf16.msra.mxu0 %v610
    %896 = vmatpush.bf16.msra.mxu0 %v608
    %897 = vmatpush.bf16.msra.mxu0 %v606
    %898 = vmatpush.bf16.msra.mxu0 %v604
    %899 = vmatmul.bf16.gmra.mxu0 %v123
    %v900 = vpop.f32.mrf.mxu0
    %v901 = vadd.f32 %v887, %v900
    %v902 = vpop.f32.mrf.mxu0
    %v903 = vadd.f32 %v889, %v902
    %904 = vdwg.mxu0
    %905 = vmatpush.bf16.msra.mxu0 0
    %906 = vmatpush.bf16.msra.mxu0 0
    %907 = vmatpush.bf16.msra.mxu0 0
    %908 = vmatpush.bf16.msra.mxu0 0
    %909 = vmatpush.bf16.msra.mxu0 0
    %910 = vmatpush.bf16.msra.mxu0 0
    %911 = vmatpush.bf16.msra.mxu0 0
    %912 = vmatpush.bf16.msra.mxu0 %v620
    %913 = vmatmul.bf16.gmra.mxu0 %v721
    %v914 = vpop.f32.mrf.mxu0
    %v915 = vadd.f32 %v901, %v914
    %v916 = vpop.f32.mrf.mxu0
    %v917 = vadd.f32 %v903, %v916
    %918 = vdwg.mxu0
    %v919 = vmul.f32 %v817, 0.5
    %v920 = vmul.f32 %v915, 0.5
    %v921 = vmul.f32 %v819, 0.5
    %v922 = vmul.f32 %v917, 0.5
    %v923 = vtanh.pop %v919
    %v924 = vtanh.pop %v920
    %v925 = vtanh.pop %v921
    %v926 = vtanh.pop %v922
    %v927 = vadd.f32 %v923, 1.0
    %v928 = vadd.f32 %v924, 1.0
    %v929 = vadd.f32 %v925, 1.0
    %v930 = vadd.f32 %v926, 1.0
    %v931 = vmul.f32 %v927, 0.5
    %v932 = vmul.f32 %v928, 0.5
    %v933 = vmul.f32 %v929, 0.5
    %v934 = vmul.f32 %v930, 0.5
    %v935 = vpack.c.bf16 %v933, %v931
    %v936 = vpack.c.bf16 %v934, %v932
    %v937 = vld [vmem:[#allocation8] sm:$0xf]
    %v938 = vld [vmem:[#allocation8 + $0x4] sm:$0xf]
    %v939 = vld [vmem:[#allocation8 + $0x8] sm:$0xf]
    %v940 = vld [vmem:[#allocation8 + $0xc] sm:$0xf]
    %v941 = vld [vmem:[#allocation8 + $0x10] sm:$0xf]
    %v942 = vld [vmem:[#allocation8 + $0x14] sm:$0xf]
    %v943 = vld [vmem:[#allocation8 + $0x18] sm:$0xf]
    %v944 = vld [vmem:[#allocation8 + $0x1c] sm:$0xf]
    %v945 = vld [vmem:[#allocation8 + $0x20] sm:$0xf]
    %v946 = vld [vmem:[#allocation8 + $0x24] sm:$0xf]
    %v947 = vld [vmem:[#allocation8 + $0x28] sm:$0xf]
    %v948 = vld [vmem:[#allocation8 + $0x2c] sm:$0xf]
    %v949 = vld [vmem:[#allocation8 + $0x30] sm:$0xf]
    %v950 = vld [vmem:[#allocation8 + $0x34] sm:$0xf]
    %v951 = vld [vmem:[#allocation8 + $0x38] sm:$0xf]
    %v952 = vld [vmem:[#allocation8 + $0x3c] sm:$0xf]
    %v953 = vld [vmem:[#allocation8 + $0x40] sm:$0xf]
    %v954 = vld [vmem:[#allocation8 + $0x44] sm:$0xf]
    %v955 = vld [vmem:[#allocation8 + $0x48] sm:$0xf]
    %v956 = vld [vmem:[#allocation8 + $0x4c] sm:$0xf]
    %v957 = vld [vmem:[#allocation8 + $0x50] sm:$0xf]
    %v958 = vld [vmem:[#allocation8 + $0x54] sm:$0xf]
    %v959 = vld [vmem:[#allocation8 + $0x58] sm:$0xf]
    %v960 = vld [vmem:[#allocation8 + $0x5c] sm:$0xf]
    %v961 = vld [vmem:[#allocation8 + $0x60] sm:$0xf]
    %v962 = vld [vmem:[#allocation8 + $0x64] sm:$0xf]
    %v963 = vld [vmem:[#allocation8 + $0x68] sm:$0xf]
    %v964 = vld [vmem:[#allocation8 + $0x6c] sm:$0xf]
    %v965 = vld [vmem:[#allocation8 + $0x70] sm:$0xf]
    %v966 = vld [vmem:[#allocation8 + $0x74] sm:$0xf]
    %v967 = vld [vmem:[#allocation8 + $0x78] sm:$0xf]
    %v968 = vld [vmem:[#allocation8 + $0x7c] sm:$0xf]
    %v969 = vld [vmem:[%s4] sm:$0x1]
    %v971 = vperm.slane %v969, 0
    %v1005 = vunpack.c.l.b16 %v937
    %v1006 = vunpack.c.l.b16 %v938
    %v1007 = vunpack.c.l.b16 %v939
    %v1008 = vunpack.c.l.b16 %v940
    %v1009 = vunpack.c.l.b16 %v941
    %v1010 = vunpack.c.l.b16 %v942
    %v1011 = vunpack.c.l.b16 %v943
    %v1012 = vunpack.c.l.b16 %v944
    %v1013 = vunpack.c.l.b16 %v945
    %v1014 = vunpack.c.l.b16 %v946
    %v1015 = vunpack.c.l.b16 %v947
    %v1016 = vunpack.c.l.b16 %v948
    %v1017 = vunpack.c.l.b16 %v949
    %v1018 = vunpack.c.l.b16 %v950
    %v1019 = vunpack.c.l.b16 %v951
    %v1020 = vunpack.c.l.b16 %v952
    %v1021 = vunpack.c.l.b16 %v953
    %v1022 = vunpack.c.l.b16 %v954
    %v1023 = vunpack.c.l.b16 %v955
    %v1024 = vunpack.c.l.b16 %v956
    %v1025 = vunpack.c.l.b16 %v957
    %v1026 = vunpack.c.l.b16 %v958
    %v1027 = vunpack.c.l.b16 %v959
    %v1028 = vunpack.c.l.b16 %v960
    %v1029 = vunpack.c.l.b16 %v961
    %v1030 = vunpack.c.l.b16 %v962
    %v1031 = vunpack.c.l.b16 %v963
    %v1032 = vunpack.c.l.b16 %v964
    %v1033 = vunpack.c.l.b16 %v965
    %v1034 = vunpack.c.l.b16 %v966
    %v1035 = vunpack.c.l.b16 %v967
    %v1036 = vunpack.c.l.b16 %v968
    %v1037 = vpack.c.b16 %v1006, %v1005
    %v1038 = vpack.c.b16 %v1008, %v1007
    %v1039 = vpack.c.b16 %v1010, %v1009
    %v1040 = vpack.c.b16 %v1012, %v1011
    %v1041 = vpack.c.b16 %v1014, %v1013
    %v1042 = vpack.c.b16 %v1016, %v1015
    %v1043 = vpack.c.b16 %v1018, %v1017
    %v1044 = vpack.c.b16 %v1020, %v1019
    %v1045 = vpack.c.b16 %v1022, %v1021
    %v1046 = vpack.c.b16 %v1024, %v1023
    %v1047 = vpack.c.b16 %v1026, %v1025
    %v1048 = vpack.c.b16 %v1028, %v1027
    %v1049 = vpack.c.b16 %v1030, %v1029
    %v1050 = vpack.c.b16 %v1032, %v1031
    %v1051 = vpack.c.b16 %v1034, %v1033
    %v1052 = vpack.c.b16 %v1036, %v1035
    %1069 = vmatpush.bf16.msra.mxu0 %v1044
    %1070 = vmatpush.bf16.msra.mxu0 %v1043
    %1071 = vmatpush.bf16.msra.mxu0 %v1042
    %1072 = vmatpush.bf16.msra.mxu0 %v1041
    %1073 = vmatpush.bf16.msra.mxu0 %v1040
    %1074 = vmatpush.bf16.msra.mxu0 %v1039
    %1075 = vmatpush.bf16.msra.mxu0 %v1038
    %1076 = vmatpush.bf16.msra.mxu0 %v1037
    %1077 = vmatmul.bf16.gmra.mxu0 %v935
    %v1078 = vpop.f32.mrf.mxu0
    %v1079 = vadd.f32 %v971, %v1078
    %v1080 = vpop.f32.mrf.mxu0
    %v1081 = vadd.f32 %v971, %v1080
    %1082 = vdwg.mxu0
    %1083 = vmatpush.bf16.msra.mxu0 %v1052
    %1084 = vmatpush.bf16.msra.mxu0 %v1051
    %1085 = vmatpush.bf16.msra.mxu0 %v1050
    %1086 = vmatpush.bf16.msra.mxu0 %v1049
    %1087 = vmatpush.bf16.msra.mxu0 %v1048
    %1088 = vmatpush.bf16.msra.mxu0 %v1047
    %1089 = vmatpush.bf16.msra.mxu0 %v1046
    %1090 = vmatpush.bf16.msra.mxu0 %v1045
    %1091 = vmatmul.bf16.gmra.mxu0 %v936
    %v1092 = vpop.f32.mrf.mxu0
    %v1093 = vadd.f32 %v1079, %v1092
    %v1094 = vpop.f32.mrf.mxu0
    %v1095 = vadd.f32 %v1081, %v1094
    %1096 = vdwg.mxu0
    %v1097 = vmul.f32 %v1093, 0.5
    %v1098 = vmul.f32 %v1095, 0.5
    %v1099 = vtanh.pop %v1097
    %v1100 = vtanh.pop %v1098
    %v1101 = vadd.f32 %v1099, 1.0
    %v1102 = vadd.f32 %v1100, 1.0
    %v1103 = vmul.f32 %v1101, 0.5
    %v1104 = vmul.f32 %v1102, 0.5
    %v1105 = vpack.c.bf16 %v1104, %v1103
    %v1106 = vld [vmem:[#allocation10] sm:$0xf]
    %v1107 = vld [vmem:[#allocation10 + $0x4] sm:$0xf]
    %v1108 = vld [vmem:[#allocation10 + $0x8] sm:$0xf]
    %v1109 = vld [vmem:[#allocation10 + $0xc] sm:$0xf]
    %v1110 = vld [vmem:[#allocation10 + $0x10] sm:$0xf]
    %v1111 = vld [vmem:[#allocation10 + $0x14] sm:$0xf]
    %v1112 = vld [vmem:[#allocation10 + $0x18] sm:$0xf]
    %v1113 = vld [vmem:[#allocation10 + $0x1c] sm:$0xf]
    %v1114 = vld [vmem:[#allocation10 + $0x20] sm:$0xf]
    %v1115 = vld [vmem:[#allocation10 + $0x24] sm:$0xf]
    %v1116 = vld [vmem:[#allocation10 + $0x28] sm:$0xf]
    %v1117 = vld [vmem:[#allocation10 + $0x2c] sm:$0xf]
    %v1118 = vld [vmem:[#allocation10 + $0x30] sm:$0xf]
    %v1119 = vld [vmem:[#allocation10 + $0x34] sm:$0xf]
    %v1120 = vld [vmem:[#allocation10 + $0x38] sm:$0xf]
    %v1121 = vld [vmem:[#allocation10 + $0x3c] sm:$0xf]
    %v1122 = vld [vmem:[%s6] sm:$0x1]
    %v1124 = vperm.slane %v1122, 0
    %v1142 = vunpack.c.l.b16 %v1106
    %v1143 = vunpack.c.l.b16 %v1107
    %v1144 = vunpack.c.l.b16 %v1108
    %v1145 = vunpack.c.l.b16 %v1109
    %v1146 = vunpack.c.l.b16 %v1110
    %v1147 = vunpack.c.l.b16 %v1111
    %v1148 = vunpack.c.l.b16 %v1112
    %v1149 = vunpack.c.l.b16 %v1113
    %v1150 = vunpack.c.l.b16 %v1114
    %v1151 = vunpack.c.l.b16 %v1115
    %v1152 = vunpack.c.l.b16 %v1116
    %v1153 = vunpack.c.l.b16 %v1117
    %v1154 = vunpack.c.l.b16 %v1118
    %v1155 = vunpack.c.l.b16 %v1119
    %v1156 = vunpack.c.l.b16 %v1120
    %v1157 = vunpack.c.l.b16 %v1121
    %v1158 = vpack.c.b16 %v1143, %v1142
    %v1159 = vpack.c.b16 %v1145, %v1144
    %v1160 = vpack.c.b16 %v1147, %v1146
    %v1161 = vpack.c.b16 %v1149, %v1148
    %v1162 = vpack.c.b16 %v1151, %v1150
    %v1163 = vpack.c.b16 %v1153, %v1152
    %v1164 = vpack.c.b16 %v1155, %v1154
    %v1165 = vpack.c.b16 %v1157, %v1156
    %1174 = vmatpush.bf16.msra.mxu0 %v1165
    %1175 = vmatpush.bf16.msra.mxu0 %v1164
    %1176 = vmatpush.bf16.msra.mxu0 %v1163
    %1177 = vmatpush.bf16.msra.mxu0 %v1162
    %1178 = vmatpush.bf16.msra.mxu0 %v1161
    %1179 = vmatpush.bf16.msra.mxu0 %v1160
    %1180 = vmatpush.bf16.msra.mxu0 %v1159
    %1181 = vmatpush.bf16.msra.mxu0 %v1158
    %1182 = vmatmul.bf16.gmra.mxu0 %v1105
    %v1183 = vpop.f32.mrf.mxu0
    %v1184 = vadd.f32 %v1124, %v1183
    %v1185 = vpop.f32.mrf.mxu0
    %v1186 = vadd.f32 %v1124, %v1185
    %1187 = vdwg.mxu0
    %v1188 = vmul.f32 %v1184, 0.5
    %v1189 = vmul.f32 %v1186, 0.5
    %v1190 = vtanh.pop %v1188
    %v1191 = vtanh.pop %v1189
    %v1192 = vadd.f32 %v1190, 1.0
    %v1193 = vadd.f32 %v1191, 1.0
    %v1194 = vmul.f32 %v1192, 0.5
    %v1195 = vmul.f32 %v1193, 0.5
    %v1196 = vpack.c.bf16 %v1194, %v1194
    %v1197 = vpack.c.bf16 %v1195, %v1195
    %1198 = vst [vmem:[#allocation11] sm:$0xf] %v1196
    %1199 = vst [vmem:[#allocation11 + $0x4] sm:$0xf] %v1197
    // Predicated region
    $region50: #{tpu_custom_call.1} parent=1 // pred_check
      _
    $region51: #{tpu_custom_call.1} parent=1 // pred_check_branch
      %1201 = sbr.rel (0) target = $region53
    $region52: #{tpu_custom_call.1} parent=1 // pred_region
      %1203 = vsyncadd [#allocation4], 0
      %s1204 = sshll.u32 [#allocation11], 4
      %s1205 = int_to_ptr.vmem [resolvable:$true] %s1204
      %s1206 = sshll.u32 %s7, 4
      %s1207 = int_to_ptr.hbm [resolvable:$true] %s1206
      %1212 = dma.vmem_to_hbm [thread:$0]  %s1205, 128, %s1207, [#allocation4], 64, 64, 4
    $region53: #{tpu_custom_call.1} parent=1 // pred_fallthru
      _
    // Predicated region
    $region54: #{tpu_custom_call.1} parent=1 // pred_check
      _
    $region55: #{tpu_custom_call.1} parent=1 // pred_check_branch
      %1214 = sbr.rel (0) target = $region57
    $region56: #{tpu_custom_call.1} parent=1 // pred_region
      %1216 = dma.done [#allocation4], 128
    $region57: #{tpu_custom_call.1} parent=1 // pred_fallthru
      _
    %1217 = vsyncpa [#allocation3], 1
    %1218 = vsyncpa [#allocation6], 1
    %1219 = vsyncpa [#allocation9], 1
    %1220 = vsyncpa [#allocation4], 1

</llo_original>
